<compile_context>
chip_gen: v7x
topology: tpu7x:2x2x1
jax: 0.10.0
libtpu: 0.0.40
codegen_flags: <defaults>
</compile_context>

<pallas_src>
import functools
import math

import jax
import jax.numpy as jnp
from jax.experimental import pallas as pl
from jax.experimental.pallas import tpu as pltpu

_DEFAULT_VMEM_CAP = 64 * 1024 * 1024   # conservative: v7x per-TensorCore VMEM


def _round_up(x: int, m: int) -> int:
    return ((x + m - 1) // m) * m


def _vmem_capacity_bytes() -> int:
    """Per-core VMEM capacity; conservative default if the query is unavailable."""
    try:
        info = pltpu.get_tpu_info()
        cap = getattr(info, "vmem_capacity_bytes", None)
        if cap:
            return int(cap)
    except Exception:
        pass
    return _DEFAULT_VMEM_CAP


def _vmem_bytes_estimate(tile_b, din0, w_shapes, io_itemsize, weight_buffers=2):
    """Rough resident-VMEM budget: weights(+biases) x buffers, double-buffered
    x/out tiles, plus the in-flight activation working set."""
    weight_bytes = sum(di * do * 2 + do * 4 for di, do in w_shapes) * weight_buffers
    dout_last = w_shapes[-1][1]
    io_bytes = 2 * tile_b * (din0 + dout_last) * io_itemsize    # 2x = double-buffered
    max_d = max([din0] + [do for _, do in w_shapes])
    act_bytes = tile_b * max_d * (4 + 2)                        # f32 acc + bf16 carry
    return weight_bytes + io_bytes + act_bytes


def _pick_batch_tiling(batch: int, cap: int):
    """Return (tile_b, padded_batch): tile_b multiple of 8, minimal batch padding."""
    cap = max(8, (cap // 8) * 8)
    b8 = _round_up(batch, 8)
    if b8 <= cap:
        return b8, b8                              # single tile, <=7 padded rows
    lo = max(cap // 2, 8)
    for d in range(cap, lo - 1, -8):               # largest divisor in [cap/2, cap]
        if b8 % d == 0:
            return d, b8
    return cap, _round_up(batch, cap)              # fall back to padding up to cap


def _ffn_kernel(*refs, num_layers: int):
    """Fused (Linear -> bias -> ReLU) x num_layers on one (tile_b, Din) batch tile.

    refs layout: x_ref, w0_ref, b0_ref, w1_ref, b1_ref, ..., out_ref
    """
    x_ref = refs[0]
    out_ref = refs[1 + 2 * num_layers]

    h = x_ref[...].astype(jnp.bfloat16)             # bf16 into the MXU
    for l in range(num_layers):                     # static loop, unrolled at trace time
        w_ref = refs[1 + 2 * l]                     # (Dl, Dl+1) bf16
        b_ref = refs[2 + 2 * l]                     # (1, Dl+1)  f32
        acc = jnp.dot(h, w_ref[...], preferred_element_type=jnp.float32)
        acc = jnp.maximum(acc + b_ref[...], 0.0)    # f32 bias + ReLU epilogue
        if l + 1 < num_layers:
            h = acc.astype(jnp.bfloat16)            # bf16 inter-layer carry
        else:
            out_ref[...] = acc.astype(out_ref.dtype)


def feedforward_fused(x, w_bf16, b_f32, *, tile_b_cap=512):
    """x: (B, Din).  w_bf16[l]: (Dl, Dl+1) bf16.  b_f32[l]: (1, Dl+1) f32."""
    num_layers = len(w_bf16)
    B, din0 = x.shape
    assert din0 == w_bf16[0].shape[0], "input dim mismatch"
    dout_last = w_bf16[-1].shape[1]
    out_dtype = x.dtype                             # bf16-in -> bf16-out supported

    vmem_cap = _vmem_capacity_bytes()
    budget_limit = int(0.85 * vmem_cap)
    w_shapes = [w.shape for w in w_bf16]

    cap = max(8, int(tile_b_cap))
    while True:
        tile_b, b_padded = _pick_batch_tiling(B, cap)
        budget = _vmem_bytes_estimate(tile_b, din0, w_shapes, x.dtype.itemsize)
        if budget <= budget_limit or cap <= 64:
            break
        cap //= 2

    if budget > budget_limit:
        raise ValueError(
            f"FeedForward resident weights + I/O tiles need ~{budget >> 20} MiB VMEM, "
            f"exceeding the ~{budget_limit >> 20} MiB per-TensorCore budget; "
            "reduce hidden dims or implement N-tiling (see TODO).")

    x_pad = x if b_padded == B else jnp.pad(x, ((0, b_padded - B), (0, 0)))
    vmem_limit = min(int(0.9 * vmem_cap),
                     max(32 * 1024 * 1024, budget + 8 * 1024 * 1024))

    def call(single_buffer_constants: bool):
        const_kw = dict(pipeline_mode=pl.Buffered(1)) if single_buffer_constants else {}
        in_specs = [pl.BlockSpec((tile_b, din0), lambda i: (i, 0))]
        operands = [x_pad]
        for w, b in zip(w_bf16, b_f32):
            di, do = w.shape
            # Constant index_map: DMA'd once, resident across all batch tiles.
            in_specs.append(pl.BlockSpec((di, do), lambda i: (0, 0), **const_kw))
            in_specs.append(pl.BlockSpec((1, do), lambda i: (0, 0), **const_kw))
            operands.append(w)
            operands.append(b)
        kernel = functools.partial(_ffn_kernel, num_layers=num_layers)
        return pl.pallas_call(
            kernel,
            out_shape=jax.ShapeDtypeStruct((b_padded, dout_last), out_dtype),
            grid_spec=pl.GridSpec(
                grid=(b_padded // tile_b,),
                in_specs=in_specs,
                out_specs=pl.BlockSpec((tile_b, dout_last), lambda i: (i, 0)),
            ),
            compiler_params=pltpu.CompilerParams(
                dimension_semantics=("parallel",),   # batch tiles across TCs on v7x
                vmem_limit_bytes=vmem_limit,
            ),
        )(*operands)

    try:
        out = call(single_buffer_constants=True)
    except Exception:
        # Fallback: if this Pallas build rejects Buffered(1), default double
        # buffering is functionally identical (just 2x weight VMEM).
        out = call(single_buffer_constants=False)

    return out if b_padded == B else out[:B]


class FeedForwardPallas:
    """JAX/Pallas port of the PyTorch FeedForward (ReLU activations, eval-mode dropout)."""

    def __init__(self, input_dim, num_layers, hidden_dims, dropout=0.0, key=None,
                 tile_b_cap=512):
        if not isinstance(hidden_dims, list):
            hidden_dims = [hidden_dims] * num_layers
        if not isinstance(dropout, list):
            dropout = [dropout] * num_layers
        assert len(hidden_dims) == num_layers and len(dropout) == num_layers
        self.input_dim = input_dim
        self.output_dim = hidden_dims[-1]
        self.dropout = dropout
        self.tile_b_cap = tile_b_cap

        input_dims = [input_dim] + hidden_dims[:-1]
        if key is None:
            key = jax.random.PRNGKey(0)

        self.weights, self.biases = [], []     # f32 (reference / export)
        self._w_bf16, self._b_f32 = [], []     # kernel operands (unpadded)
        for din, dout in zip(input_dims, hidden_dims):
            key, kw, kb = jax.random.split(key, 3)
            # torch.nn.Linear default init: U(-1/sqrt(din), 1/sqrt(din))
            bound = 1.0 / math.sqrt(din)
            w = jax.random.uniform(kw, (din, dout), jnp.float32, -bound, bound)
            b = jax.random.uniform(kb, (dout,), jnp.float32, -bound, bound)
            self.weights.append(w)
            self.biases.append(b)
            self._w_bf16.append(w.astype(jnp.bfloat16))
            self._b_f32.append(b.reshape(1, dout))

    def get_output_dim(self):
        return self.output_dim

    def get_input_dim(self):
        return self.input_dim

    def __call__(self, x: jax.Array, training: bool = False) -> jax.Array:
        if training and any(p != 0.0 for p in self.dropout):
            # TODO(synk): training-mode stochastic dropout not implemented in-kernel.
            raise NotImplementedError("training-mode dropout masking is not supported")
        return feedforward_fused(x, self._w_bf16, self._b_f32,
                                 tile_b_cap=self.tile_b_cap)


def _reference(x, weights, biases):
    """Matches kernel numerics: bf16 MXU inputs, f32 accumulation, f32 bias+ReLU,
    bf16 inter-layer carry.  (Weights are bf16, so ~1e-2 from a true f32 Linear.)"""
    h = x.astype(jnp.bfloat16)
    for l, (w, b) in enumerate(zip(weights, biases)):
        acc = jnp.dot(h, w.astype(jnp.bfloat16),
                      preferred_element_type=jnp.float32) + b
        acc = jnp.maximum(acc, 0.0)
        h = acc.astype(jnp.bfloat16) if l + 1 < len(weights) else acc
    return h


if __name__ == "__main__":
    key = jax.random.PRNGKey(0)
    kx, kx2, kparams = jax.random.split(key, 3)

    batch, input_dim = 8, 32
    hidden_dims = [64, 32]
    ff = FeedForwardPallas(input_dim, num_layers=2, hidden_dims=hidden_dims,
                           dropout=0.2, key=kparams)

    # f32 in -> f32 out
    x = jax.random.normal(kx, (batch, input_dim), jnp.float32)
    y = jax.block_until_ready(ff(x))
    y_ref = _reference(x, ff.weights, ff.biases)
    assert y.shape == (batch, hidden_dims[-1]), f"bad shape {y.shape}"
    assert y.dtype == jnp.float32
    assert jnp.allclose(y, y_ref, atol=1e-2, rtol=1e-2), "mismatch vs reference (f32)"

    # awkward batch size -> exercises batch padding path
    x2 = jax.random.normal(kx2, (10, input_dim), jnp.float32)
    y2 = jax.block_until_ready(ff(x2))
    y2_ref = _reference(x2, ff.weights, ff.biases)
    assert y2.shape == (10, hidden_dims[-1])
    assert jnp.allclose(y2, y2_ref, atol=1e-2, rtol=1e-2), "mismatch vs reference (pad)"

    # bf16 end-to-end I/O
    xb = x.astype(jnp.bfloat16)
    yb = jax.block_until_ready(ff(xb))
    assert yb.dtype == jnp.bfloat16
    assert jnp.allclose(yb.astype(jnp.float32), y_ref, atol=5e-2, rtol=5e-2), \
        "mismatch vs reference (bf16 I/O)"

    print("KERNEL_OK")
</pallas_src>

<mosaic_0001>
module attributes {stable_mosaic.version = 11 : i64} {
  func.func @_ffn_kernel(%arg0: i32, %arg1: memref<8x32xf32, #tpu.memory_space<vmem>>, %arg2: memref<32x64xbf16, #tpu.memory_space<vmem>>, %arg3: memref<1x64xf32, #tpu.memory_space<vmem>>, %arg4: memref<64x32xbf16, #tpu.memory_space<vmem>>, %arg5: memref<1x32xf32, #tpu.memory_space<vmem>>, %arg6: memref<8x32xf32, #tpu.memory_space<vmem>>) attributes {dimension_semantics = [#tpu.dimension_semantics<parallel>], iteration_bounds = array<i64: 1>, scalar_prefetch = 0 : i64, scratch_operands = 0 : i64, tpu.core_type = #tpu.core_type<tc>, window_params = [{transform_indices = @transform_0, window_bounds = array<i64: 8, 32>}, {pipeline_mode = #tpu.pipeline_mode<synchronous>, transform_indices = @transform_1, window_bounds = array<i64: 32, 64>}, {pipeline_mode = #tpu.pipeline_mode<synchronous>, transform_indices = @transform_2, window_bounds = array<i64: 1, 64>}, {pipeline_mode = #tpu.pipeline_mode<synchronous>, transform_indices = @transform_3, window_bounds = array<i64: 64, 32>}, {pipeline_mode = #tpu.pipeline_mode<synchronous>, transform_indices = @transform_4, window_bounds = array<i64: 1, 32>}, {transform_indices = @transform_5, window_bounds = array<i64: 8, 32>}]} {
    %c0 = arith.constant 0 : index
    %c0_0 = arith.constant 0 : index
    %0 = vector.load %arg1[%c0, %c0_0] : memref<8x32xf32, #tpu.memory_space<vmem>>, vector<8x32xf32>
    %1 = arith.truncf %0 : vector<8x32xf32> to vector<8x32xbf16>
    %c0_1 = arith.constant 0 : index
    %c0_2 = arith.constant 0 : index
    %2 = vector.load %arg2[%c0_1, %c0_2] : memref<32x64xbf16, #tpu.memory_space<vmem>>, vector<32x64xbf16>
    %cst = arith.constant dense<0.000000e+00> : vector<8x64xf32>
    %3 = tpu.matmul %1, %2, %cst {dimension_numbers = #tpu.dot_dimension_numbers<[1], [0], [0], [1], [0, 0, 1, 1], [], []>} : vector<8x32xbf16>, vector<32x64xbf16>, vector<8x64xf32> -> vector<8x64xf32>
    %c0_3 = arith.constant 0 : index
    %c0_4 = arith.constant 0 : index
    %4 = vector.load %arg3[%c0_3, %c0_4] : memref<1x64xf32, #tpu.memory_space<vmem>>, vector<1x64xf32>
    %5 = vector.broadcast %4 : vector<1x64xf32> to vector<8x64xf32>
    %6 = arith.addf %3, %5 : vector<8x64xf32>
    %cst_5 = arith.constant 0.000000e+00 : f32
    %7 = vector.broadcast %cst_5 : f32 to vector<8x64xf32>
    %8 = arith.maximumf %6, %7 : vector<8x64xf32>
    %9 = arith.truncf %8 : vector<8x64xf32> to vector<8x64xbf16>
    %c0_6 = arith.constant 0 : index
    %c0_7 = arith.constant 0 : index
    %10 = vector.load %arg4[%c0_6, %c0_7] : memref<64x32xbf16, #tpu.memory_space<vmem>>, vector<64x32xbf16>
    %cst_8 = arith.constant dense<0.000000e+00> : vector<8x32xf32>
    %11 = tpu.matmul %9, %10, %cst_8 {dimension_numbers = #tpu.dot_dimension_numbers<[1], [0], [0], [1], [0, 0, 1, 1], [], []>} : vector<8x64xbf16>, vector<64x32xbf16>, vector<8x32xf32> -> vector<8x32xf32>
    %c0_9 = arith.constant 0 : index
    %c0_10 = arith.constant 0 : index
    %12 = vector.load %arg5[%c0_9, %c0_10] : memref<1x32xf32, #tpu.memory_space<vmem>>, vector<1x32xf32>
    %13 = vector.broadcast %12 : vector<1x32xf32> to vector<8x32xf32>
    %14 = arith.addf %11, %13 : vector<8x32xf32>
    %cst_11 = arith.constant 0.000000e+00 : f32
    %15 = vector.broadcast %cst_11 : f32 to vector<8x32xf32>
    %16 = arith.maximumf %14, %15 : vector<8x32xf32>
    %c0_12 = arith.constant 0 : index
    %c0_13 = arith.constant 0 : index
    %17 = vector.load %arg6[%c0_12, %c0_13] : memref<8x32xf32, #tpu.memory_space<vmem>>, vector<8x32xf32>
    tpu.vector_store %arg6[%c0_12, %c0_13], %16 {strides = array<i32>} : memref<8x32xf32, #tpu.memory_space<vmem>>, vector<8x32xf32>,
    return
  }
  func.func @transform_0(%arg0: i32) -> (i32, i32) {
    %c0_i32 = arith.constant 0 : i32
    %c0_i32_0 = arith.constant 0 : i32
    return %arg0, %c0_i32 : i32, i32
  }
  func.func @transform_1(%arg0: i32) -> (i32, i32) {
    %c0_i32 = arith.constant 0 : i32
    %c0_i32_0 = arith.constant 0 : i32
    %c0_i32_1 = arith.constant 0 : i32
    return %c0_i32, %c0_i32_0 : i32, i32
  }
  func.func @transform_2(%arg0: i32) -> (i32, i32) {
    %c0_i32 = arith.constant 0 : i32
    %c0_i32_0 = arith.constant 0 : i32
    %c0_i32_1 = arith.constant 0 : i32
    return %c0_i32, %c0_i32_0 : i32, i32
  }
  func.func @transform_3(%arg0: i32) -> (i32, i32) {
    %c0_i32 = arith.constant 0 : i32
    %c0_i32_0 = arith.constant 0 : i32
    %c0_i32_1 = arith.constant 0 : i32
    return %c0_i32, %c0_i32_0 : i32, i32
  }
  func.func @transform_4(%arg0: i32) -> (i32, i32) {
    %c0_i32 = arith.constant 0 : i32
    %c0_i32_0 = arith.constant 0 : i32
    %c0_i32_1 = arith.constant 0 : i32
    return %c0_i32, %c0_i32_0 : i32, i32
  }
  func.func @transform_5(%arg0: i32) -> (i32, i32) {
    %c0_i32 = arith.constant 0 : i32
    %c0_i32_0 = arith.constant 0 : i32
    return %arg0, %c0_i32 : i32, i32
  }
}

module attributes {stable_mosaic.version = 11 : i64} {
  func.func @_ffn_kernel(%arg0: i32, %arg1: memref<8x32xf32, #tpu.memory_space<vmem>>, %arg2: memref<32x64xbf16, #tpu.memory_space<vmem>>, %arg3: memref<1x64xf32, #tpu.memory_space<vmem>>, %arg4: memref<64x32xbf16, #tpu.memory_space<vmem>>, %arg5: memref<1x32xf32, #tpu.memory_space<vmem>>, %arg6: memref<8x32xf32, #tpu.memory_space<vmem>>) attributes {dimension_semantics = [#tpu.dimension_semantics<parallel>], iteration_bounds = array<i64: 1>, scalar_prefetch = 0 : i64, scratch_operands = 0 : i64, tpu.core_type = #tpu.core_type<tc>, window_params = [{transform_indices = @transform_0, window_bounds = array<i64: 8, 32>}, {pipeline_mode = #tpu.pipeline_mode<synchronous>, transform_indices = @transform_1, window_bounds = array<i64: 32, 64>}, {pipeline_mode = #tpu.pipeline_mode<synchronous>, transform_indices = @transform_2, window_bounds = array<i64: 1, 64>}, {pipeline_mode = #tpu.pipeline_mode<synchronous>, transform_indices = @transform_3, window_bounds = array<i64: 64, 32>}, {pipeline_mode = #tpu.pipeline_mode<synchronous>, transform_indices = @transform_4, window_bounds = array<i64: 1, 32>}, {transform_indices = @transform_5, window_bounds = array<i64: 8, 32>}]} {
    %c0 = arith.constant 0 : index
    %c0_0 = arith.constant 0 : index
    %0 = vector.load %arg1[%c0, %c0_0] : memref<8x32xf32, #tpu.memory_space<vmem>>, vector<8x32xf32>
    %1 = arith.truncf %0 : vector<8x32xf32> to vector<8x32xbf16>
    %c0_1 = arith.constant 0 : index
    %c0_2 = arith.constant 0 : index
    %2 = vector.load %arg2[%c0_1, %c0_2] : memref<32x64xbf16, #tpu.memory_space<vmem>>, vector<32x64xbf16>
    %cst = arith.constant dense<0.000000e+00> : vector<8x64xf32>
    %3 = tpu.matmul %1, %2, %cst {dimension_numbers = #tpu.dot_dimension_numbers<[1], [0], [0], [1], [0, 0, 1, 1], [], []>} : vector<8x32xbf16>, vector<32x64xbf16>, vector<8x64xf32> -> vector<8x64xf32>
    %c0_3 = arith.constant 0 : index
    %c0_4 = arith.constant 0 : index
    %4 = vector.load %arg3[%c0_3, %c0_4] : memref<1x64xf32, #tpu.memory_space<vmem>>, vector<1x64xf32>
    %5 = vector.broadcast %4 : vector<1x64xf32> to vector<8x64xf32>
    %6 = arith.addf %3, %5 : vector<8x64xf32>
    %cst_5 = arith.constant 0.000000e+00 : f32
    %7 = vector.broadcast %cst_5 : f32 to vector<8x64xf32>
    %8 = arith.maximumf %6, %7 : vector<8x64xf32>
    %9 = arith.truncf %8 : vector<8x64xf32> to vector<8x64xbf16>
    %c0_6 = arith.constant 0 : index
    %c0_7 = arith.constant 0 : index
    %10 = vector.load %arg4[%c0_6, %c0_7] : memref<64x32xbf16, #tpu.memory_space<vmem>>, vector<64x32xbf16>
    %cst_8 = arith.constant dense<0.000000e+00> : vector<8x32xf32>
    %11 = tpu.matmul %9, %10, %cst_8 {dimension_numbers = #tpu.dot_dimension_numbers<[1], [0], [0], [1], [0, 0, 1, 1], [], []>} : vector<8x64xbf16>, vector<64x32xbf16>, vector<8x32xf32> -> vector<8x32xf32>
    %c0_9 = arith.constant 0 : index
    %c0_10 = arith.constant 0 : index
    %12 = vector.load %arg5[%c0_9, %c0_10] : memref<1x32xf32, #tpu.memory_space<vmem>>, vector<1x32xf32>
    %13 = vector.broadcast %12 : vector<1x32xf32> to vector<8x32xf32>
    %14 = arith.addf %11, %13 : vector<8x32xf32>
    %cst_11 = arith.constant 0.000000e+00 : f32
    %15 = vector.broadcast %cst_11 : f32 to vector<8x32xf32>
    %16 = arith.maximumf %14, %15 : vector<8x32xf32>
    %c0_12 = arith.constant 0 : index
    %c0_13 = arith.constant 0 : index
    %17 = vector.load %arg6[%c0_12, %c0_13] : memref<8x32xf32, #tpu.memory_space<vmem>>, vector<8x32xf32>
    tpu.vector_store %arg6[%c0_12, %c0_13], %16 {strides = array<i32>} : memref<8x32xf32, #tpu.memory_space<vmem>>, vector<8x32xf32>,
    return
  }
  func.func @transform_0(%arg0: i32) -> (i32, i32) {
    %c0_i32 = arith.constant 0 : i32
    %c0_i32_0 = arith.constant 0 : i32
    return %arg0, %c0_i32 : i32, i32
  }
  func.func @transform_1(%arg0: i32) -> (i32, i32) {
    %c0_i32 = arith.constant 0 : i32
    %c0_i32_0 = arith.constant 0 : i32
    %c0_i32_1 = arith.constant 0 : i32
    return %c0_i32, %c0_i32_0 : i32, i32
  }
  func.func @transform_2(%arg0: i32) -> (i32, i32) {
    %c0_i32 = arith.constant 0 : i32
    %c0_i32_0 = arith.constant 0 : i32
    %c0_i32_1 = arith.constant 0 : i32
    return %c0_i32, %c0_i32_0 : i32, i32
  }
  func.func @transform_3(%arg0: i32) -> (i32, i32) {
    %c0_i32 = arith.constant 0 : i32
    %c0_i32_0 = arith.constant 0 : i32
    %c0_i32_1 = arith.constant 0 : i32
    return %c0_i32, %c0_i32_0 : i32, i32
  }
  func.func @transform_4(%arg0: i32) -> (i32, i32) {
    %c0_i32 = arith.constant 0 : i32
    %c0_i32_0 = arith.constant 0 : i32
    %c0_i32_1 = arith.constant 0 : i32
    return %c0_i32, %c0_i32_0 : i32, i32
  }
  func.func @transform_5(%arg0: i32) -> (i32, i32) {
    %c0_i32 = arith.constant 0 : i32
    %c0_i32_0 = arith.constant 0 : i32
    return %arg0, %c0_i32 : i32, i32
  }
}

</mosaic_0001>

<llo_original>
// kernel: tpu_custom_call.1
$region0: #{tpu_custom_call.1}
  #allocation0 [shape = 'u32[]', space=smem, size = 0x4, offset = 0x4, fixed_abs, tag = 'smem constant byte address 0x4 - core index']
  #allocation1 [shape = 'u32[144,128]{1,0:T(1,128)}', space=vmem, size = 0x12000, scoped, tag = 'internal scratch']
  %s0 = inlined_call_operand.vmem [shape: f32[8,32], index: 0, kind: input, shape index: {}]
  %s1 = inlined_call_operand.vmem [shape: bf16[32,64], index: 1, kind: input, shape index: {}]
  %s2 = inlined_call_operand.vmem [shape: f32[1,64], index: 2, kind: input, shape index: {}]
  %s3 = inlined_call_operand.vmem [shape: bf16[64,32], index: 3, kind: input, shape index: {}]
  %s4 = inlined_call_operand.vmem [shape: f32[1,32], index: 4, kind: input, shape index: {}]
  %s5 = inlined_call_operand.hbm [shape: f32[8,32], index: 5, kind: output, shape index: {}]
  %s6 = sld [smem:[#allocation0]]
  $region30: #{tpu_custom_call.1} parent=0
    _
  %s8 = ssub.s32 1, %s6
  %s9 = scalar_select 0, %s8, %s6
  $region1: #{tpu_custom_call.1} parent=0
    #allocation2 [shape = 'u8[4096]{0}', space=vmem, size = 0x1000, scoped, tag = 'output window, operand 0, single buffered']
    #allocation3 [shape = 's32[1]{0}', space=sflag, size = 0x4, scoped, tag = 'scoped memory for tpu_custom_call.1']
    %10 = vsyncpa [#allocation3], 0
    // Predicated region
    $region2: #{tpu_custom_call.1} parent=1 // pred_check
      _
    $region3: #{tpu_custom_call.1} parent=1 // pred_check_branch
      %12 = sbr.rel (0) target = $region5
    $region4: #{tpu_custom_call.1} parent=1 // pred_region
      _
    $region5: #{tpu_custom_call.1} parent=1 // pred_fallthru
      _
    // Predicated region
    $region6: #{tpu_custom_call.1} parent=1 // pred_check
      _
    $region7: #{tpu_custom_call.1} parent=1 // pred_check_branch
      %14 = sbr.rel (0) target = $region9
    $region8: #{tpu_custom_call.1} parent=1 // pred_region
      _
    $region9: #{tpu_custom_call.1} parent=1 // pred_fallthru
      _
    // Predicated region
    $region10: #{tpu_custom_call.1} parent=1 // pred_check
      _
    $region11: #{tpu_custom_call.1} parent=1 // pred_check_branch
      %16 = sbr.rel (0) target = $region13
    $region12: #{tpu_custom_call.1} parent=1 // pred_region
      _
    $region13: #{tpu_custom_call.1} parent=1 // pred_fallthru
      _
    // Predicated region
    $region14: #{tpu_custom_call.1} parent=1 // pred_check
      _
    $region15: #{tpu_custom_call.1} parent=1 // pred_check_branch
      %18 = sbr.rel (0) target = $region17
    $region16: #{tpu_custom_call.1} parent=1 // pred_region
      _
    $region17: #{tpu_custom_call.1} parent=1 // pred_fallthru
      _
    // Predicated region
    $region18: #{tpu_custom_call.1} parent=1 // pred_check
      _
    $region19: #{tpu_custom_call.1} parent=1 // pred_check_branch
      %20 = sbr.rel (0) target = $region21
    $region20: #{tpu_custom_call.1} parent=1 // pred_region
      _
    $region21: #{tpu_custom_call.1} parent=1 // pred_fallthru
      _
    %v22 = vld [vmem:[%s0] sm:$0xff]
    %v23 = vpack.c.bf16 %v22, %v22
    %v24 = vld [vmem:[%s1] sm:$0xf]
    %v25 = vld [vmem:[%s1 + $0x4] sm:$0xf]
    %v26 = vld [vmem:[%s1 + $0x8] sm:$0xf]
    %v27 = vld [vmem:[%s1 + $0xc] sm:$0xf]
    %v28 = vld [vmem:[%s2] sm:$0x1]
    %v30 = vlaneseq
    %v31 = vshrl.u32 %v30, 7
    %v32 = vsub.s32 0, %v31
    %v33 = vrot.slane %v28, %v32
    %v39 = vunpack.c.l.b16 %v24
    %v40 = vunpack.c.l.b16 %v25
    %v41 = vunpack.c.l.b16 %v26
    %v42 = vunpack.c.l.b16 %v27
    %v43 = vpack.c.b16 %v40, %v39
    %v44 = vpack.c.b16 %v42, %v41
    %vm47 = vcmask 261120
    %v49 = vsel %vm47, %v23, 0
    %51 = vmatprep.subr.bf16.mxu0 0
    %52 = vmatpush1.bf16.msra.mxu0 %v43
    %53 = vmatprep.subr.bf16.mxu0 0
    %54 = vmatpush1.bf16.msra.mxu0 %v44
    %55 = vmatprep.subr.bf16.mxu0 0
    %56 = vmatpush1.bf16.msra.mxu0 0
    %57 = vmatprep.subr.bf16.mxu0 0
    %58 = vmatpush1.bf16.msra.mxu0 0
    %59 = vmatprep.subr.bf16.mxu0 0
    %60 = vmatpush1.bf16.msra.mxu0 0
    %61 = vmatprep.subr.bf16.mxu0 0
    %62 = vmatpush1.bf16.msra.mxu0 0
    %63 = vmatprep.subr.bf16.mxu0 0
    %64 = vmatpush1.bf16.msra.mxu0 0
    %65 = vmatprep.subr.bf16.mxu0 0
    %66 = vmatpush1.bf16.msra.mxu0 0
    %67 = vmatprep.subr.bf16.mxu0 0
    %68 = vmatpush1.bf16.msra.mxu0 0
    %69 = vmatprep.subr.bf16.mxu0 0
    %70 = vmatpush1.bf16.msra.mxu0 0
    %71 = vmatprep.subr.bf16.mxu0 0
    %72 = vmatpush1.bf16.msra.mxu0 0
    %73 = vmatprep.subr.bf16.mxu0 0
    %74 = vmatpush1.bf16.msra.mxu0 0
    %75 = vmatprep.subr.bf16.mxu0 0
    %76 = vmatpush1.bf16.msra.mxu0 0
    %77 = vmatprep.subr.bf16.mxu0 0
    %78 = vmatpush1.bf16.msra.mxu0 0
    %79 = vmatprep.subr.bf16.mxu0 0
    %80 = vmatpush1.bf16.msra.mxu0 0
    %81 = vmatprep.subr.bf16.mxu0 0
    %82 = vmatpush1.bf16.msra.mxu0 0
    %83 = vmatprep.mubr.bf16.mxu0 0
    %84 = vmatmul.mubr.bf16.gmra.mrb[0].mxu0 %v49
    %v85 = vpop.f32.mrb[0].mxu0
    %v86 = vadd.f32 %v33, %v85
    %v87 = vpop.f32.mrb[0].mxu0
    %v88 = vpop.f32.mrb[0].mxu0
    %v89 = vpop.f32.mrb[0].mxu0
    %90 = vdwg.mxu0
    %v91 = vmax.f32 %v86, 0.0
    %v92 = vpack.c.bf16 %v91, %v91
    %v93 = vld [vmem:[%s3] sm:$0xf]
    %v94 = vld [vmem:[%s3 + $0x4] sm:$0xf]
    %v95 = vld [vmem:[%s3 + $0x8] sm:$0xf]
    %v96 = vld [vmem:[%s3 + $0xc] sm:$0xf]
    %v97 = vld [vmem:[%s3 + $0x10] sm:$0xf]
    %v98 = vld [vmem:[%s3 + $0x14] sm:$0xf]
    %v99 = vld [vmem:[%s3 + $0x18] sm:$0xf]
    %v100 = vld [vmem:[%s3 + $0x1c] sm:$0xf]
    %v101 = vld [vmem:[%s4] sm:$0x1]
    %v103 = vlaneseq
    %v104 = vshrl.u32 %v103, 7
    %v105 = vsub.s32 0, %v104
    %v106 = vrot.slane %v101, %v105
    %v116 = vunpack.c.l.b16 %v93
    %v117 = vunpack.c.l.b16 %v94
    %v118 = vunpack.c.l.b16 %v95
    %v119 = vunpack.c.l.b16 %v96
    %v120 = vunpack.c.l.b16 %v97
    %v121 = vunpack.c.l.b16 %v98
    %v122 = vunpack.c.l.b16 %v99
    %v123 = vunpack.c.l.b16 %v100
    %v124 = vpack.c.b16 %v117, %v116
    %v125 = vpack.c.b16 %v119, %v118
    %v126 = vpack.c.b16 %v121, %v120
    %v127 = vpack.c.b16 %v123, %v122
    %vm132 = vcmask 523264
    %v134 = vsel %vm132, %v92, 0
    %136 = vmatprep.subr.bf16.mxu0 0
    %137 = vmatpush1.bf16.msra.mxu0 %v124
    %138 = vmatprep.subr.bf16.mxu0 0
    %139 = vmatpush1.bf16.msra.mxu0 %v125
    %140 = vmatprep.subr.bf16.mxu0 0
    %141 = vmatpush1.bf16.msra.mxu0 %v126
    %142 = vmatprep.subr.bf16.mxu0 0
    %143 = vmatpush1.bf16.msra.mxu0 %v127
    %144 = vmatprep.subr.bf16.mxu0 0
    %145 = vmatpush1.bf16.msra.mxu0 0
    %146 = vmatprep.subr.bf16.mxu0 0
    %147 = vmatpush1.bf16.msra.mxu0 0
    %148 = vmatprep.subr.bf16.mxu0 0
    %149 = vmatpush1.bf16.msra.mxu0 0
    %150 = vmatprep.subr.bf16.mxu0 0
    %151 = vmatpush1.bf16.msra.mxu0 0
    %152 = vmatprep.subr.bf16.mxu0 0
    %153 = vmatpush1.bf16.msra.mxu0 0
    %154 = vmatprep.subr.bf16.mxu0 0
    %155 = vmatpush1.bf16.msra.mxu0 0
    %156 = vmatprep.subr.bf16.mxu0 0
    %157 = vmatpush1.bf16.msra.mxu0 0
    %158 = vmatprep.subr.bf16.mxu0 0
    %159 = vmatpush1.bf16.msra.mxu0 0
    %160 = vmatprep.subr.bf16.mxu0 0
    %161 = vmatpush1.bf16.msra.mxu0 0
    %162 = vmatprep.subr.bf16.mxu0 0
    %163 = vmatpush1.bf16.msra.mxu0 0
    %164 = vmatprep.subr.bf16.mxu0 0
    %165 = vmatpush1.bf16.msra.mxu0 0
    %166 = vmatprep.subr.bf16.mxu0 0
    %167 = vmatpush1.bf16.msra.mxu0 0
    %168 = vmatprep.mubr.bf16.mxu0 0
    %169 = vmatmul.mubr.bf16.gmra.mrb[0].mxu0 %v134
    %v170 = vpop.f32.mrb[0].mxu0
    %v171 = vadd.f32 %v106, %v170
    %v172 = vpop.f32.mrb[0].mxu0
    %v173 = vpop.f32.mrb[0].mxu0
    %v174 = vpop.f32.mrb[0].mxu0
    %175 = vdwg.mxu0
    %v176 = vmax.f32 %v171, 0.0
    %177 = vst.msk [vmem:[#allocation2] sm:$0xff] %vm47, %v176
    // Predicated region
    $region22: #{tpu_custom_call.1} parent=1 // pred_check
      _
    $region23: #{tpu_custom_call.1} parent=1 // pred_check_branch
      %179 = sbr.rel (0) target = $region25
    $region24: #{tpu_custom_call.1} parent=1 // pred_region
      %s181 = ssub.s32 128, 128
      %182 = vsyncadd [#allocation3], %s181
      %s184 = sshll.u32 [#allocation2], 4
      %s185 = int_to_ptr.vmem [resolvable:$true] %s184
      %187 = dma.vmem_to_hbm [thread:$0]  %s185, 128, %s5, [#allocation3]
    $region25: #{tpu_custom_call.1} parent=1 // pred_fallthru
      _
    // Predicated region
    $region26: #{tpu_custom_call.1} parent=1 // pred_check
      _
    $region27: #{tpu_custom_call.1} parent=1 // pred_check_branch
      %189 = sbr.rel (0) target = $region29
    $region28: #{tpu_custom_call.1} parent=1 // pred_region
      %190 = dma.done [#allocation3], 128
    $region29: #{tpu_custom_call.1} parent=1 // pred_fallthru
      _
    %191 = vsyncpa [#allocation3], 1

// kernel: tpu_custom_call.1
$region0: #{tpu_custom_call.1}
  #allocation0 [shape = 'u32[]', space=smem, size = 0x4, offset = 0x4, fixed_abs, tag = 'smem constant byte address 0x4 - core index']
  #allocation1 [shape = 'u32[144,128]{1,0:T(1,128)}', space=vmem, size = 0x12000, scoped, tag = 'internal scratch']
  %s0 = inlined_call_operand.vmem [shape: f32[8,32], index: 0, kind: input, shape index: {}]
  %s1 = inlined_call_operand.vmem [shape: bf16[32,64], index: 1, kind: input, shape index: {}]
  %s2 = inlined_call_operand.vmem [shape: f32[1,64], index: 2, kind: input, shape index: {}]
  %s3 = inlined_call_operand.vmem [shape: bf16[64,32], index: 3, kind: input, shape index: {}]
  %s4 = inlined_call_operand.vmem [shape: f32[1,32], index: 4, kind: input, shape index: {}]
  %s5 = inlined_call_operand.hbm [shape: f32[8,32], index: 5, kind: output, shape index: {}]
  %s6 = sld [smem:[#allocation0]]
  $region30: #{tpu_custom_call.1} parent=0
    _
  %s8 = ssub.s32 1, %s6
  %s9 = scalar_select 0, %s8, %s6
  $region1: #{tpu_custom_call.1} parent=0
    #allocation2 [shape = 'u8[4096]{0}', space=vmem, size = 0x1000, scoped, tag = 'output window, operand 0, single buffered']
    #allocation3 [shape = 's32[1]{0}', space=sflag, size = 0x4, scoped, tag = 'scoped memory for tpu_custom_call.1']
    %10 = vsyncpa [#allocation3], 0
    // Predicated region
    $region2: #{tpu_custom_call.1} parent=1 // pred_check
      _
    $region3: #{tpu_custom_call.1} parent=1 // pred_check_branch
      %12 = sbr.rel (0) target = $region5
    $region4: #{tpu_custom_call.1} parent=1 // pred_region
      _
    $region5: #{tpu_custom_call.1} parent=1 // pred_fallthru
      _
    // Predicated region
    $region6: #{tpu_custom_call.1} parent=1 // pred_check
      _
    $region7: #{tpu_custom_call.1} parent=1 // pred_check_branch
      %14 = sbr.rel (0) target = $region9
    $region8: #{tpu_custom_call.1} parent=1 // pred_region
      _
    $region9: #{tpu_custom_call.1} parent=1 // pred_fallthru
      _
    // Predicated region
    $region10: #{tpu_custom_call.1} parent=1 // pred_check
      _
    $region11: #{tpu_custom_call.1} parent=1 // pred_check_branch
      %16 = sbr.rel (0) target = $region13
    $region12: #{tpu_custom_call.1} parent=1 // pred_region
      _
    $region13: #{tpu_custom_call.1} parent=1 // pred_fallthru
      _
    // Predicated region
    $region14: #{tpu_custom_call.1} parent=1 // pred_check
      _
    $region15: #{tpu_custom_call.1} parent=1 // pred_check_branch
      %18 = sbr.rel (0) target = $region17
    $region16: #{tpu_custom_call.1} parent=1 // pred_region
      _
    $region17: #{tpu_custom_call.1} parent=1 // pred_fallthru
      _
    // Predicated region
    $region18: #{tpu_custom_call.1} parent=1 // pred_check
      _
    $region19: #{tpu_custom_call.1} parent=1 // pred_check_branch
      %20 = sbr.rel (0) target = $region21
    $region20: #{tpu_custom_call.1} parent=1 // pred_region
      _
    $region21: #{tpu_custom_call.1} parent=1 // pred_fallthru
      _
    %v22 = vld [vmem:[%s0] sm:$0xff]
    %v23 = vpack.c.bf16 %v22, %v22
    %v24 = vld [vmem:[%s1] sm:$0xf]
    %v25 = vld [vmem:[%s1 + $0x4] sm:$0xf]
    %v26 = vld [vmem:[%s1 + $0x8] sm:$0xf]
    %v27 = vld [vmem:[%s1 + $0xc] sm:$0xf]
    %v28 = vld [vmem:[%s2] sm:$0x1]
    %v30 = vlaneseq
    %v31 = vshrl.u32 %v30, 7
    %v32 = vsub.s32 0, %v31
    %v33 = vrot.slane %v28, %v32
    %v39 = vunpack.c.l.b16 %v24
    %v40 = vunpack.c.l.b16 %v25
    %v41 = vunpack.c.l.b16 %v26
    %v42 = vunpack.c.l.b16 %v27
    %v43 = vpack.c.b16 %v40, %v39
    %v44 = vpack.c.b16 %v42, %v41
    %vm47 = vcmask 261120
    %v49 = vsel %vm47, %v23, 0
    %51 = vmatprep.subr.bf16.mxu0 0
    %52 = vmatpush1.bf16.msra.mxu0 %v43
    %53 = vmatprep.subr.bf16.mxu0 0
    %54 = vmatpush1.bf16.msra.mxu0 %v44
    %55 = vmatprep.subr.bf16.mxu0 0
    %56 = vmatpush1.bf16.msra.mxu0 0
    %57 = vmatprep.subr.bf16.mxu0 0
    %58 = vmatpush1.bf16.msra.mxu0 0
    %59 = vmatprep.subr.bf16.mxu0 0
    %60 = vmatpush1.bf16.msra.mxu0 0
    %61 = vmatprep.subr.bf16.mxu0 0
    %62 = vmatpush1.bf16.msra.mxu0 0
    %63 = vmatprep.subr.bf16.mxu0 0
    %64 = vmatpush1.bf16.msra.mxu0 0
    %65 = vmatprep.subr.bf16.mxu0 0
    %66 = vmatpush1.bf16.msra.mxu0 0
    %67 = vmatprep.subr.bf16.mxu0 0
    %68 = vmatpush1.bf16.msra.mxu0 0
    %69 = vmatprep.subr.bf16.mxu0 0
    %70 = vmatpush1.bf16.msra.mxu0 0
    %71 = vmatprep.subr.bf16.mxu0 0
    %72 = vmatpush1.bf16.msra.mxu0 0
    %73 = vmatprep.subr.bf16.mxu0 0
    %74 = vmatpush1.bf16.msra.mxu0 0
    %75 = vmatprep.subr.bf16.mxu0 0
    %76 = vmatpush1.bf16.msra.mxu0 0
    %77 = vmatprep.subr.bf16.mxu0 0
    %78 = vmatpush1.bf16.msra.mxu0 0
    %79 = vmatprep.subr.bf16.mxu0 0
    %80 = vmatpush1.bf16.msra.mxu0 0
    %81 = vmatprep.subr.bf16.mxu0 0
    %82 = vmatpush1.bf16.msra.mxu0 0
    %83 = vmatprep.mubr.bf16.mxu0 0
    %84 = vmatmul.mubr.bf16.gmra.mrb[0].mxu0 %v49
    %v85 = vpop.f32.mrb[0].mxu0
    %v86 = vadd.f32 %v33, %v85
    %v87 = vpop.f32.mrb[0].mxu0
    %v88 = vpop.f32.mrb[0].mxu0
    %v89 = vpop.f32.mrb[0].mxu0
    %90 = vdwg.mxu0
    %v91 = vmax.f32 %v86, 0.0
    %v92 = vpack.c.bf16 %v91, %v91
    %v93 = vld [vmem:[%s3] sm:$0xf]
    %v94 = vld [vmem:[%s3 + $0x4] sm:$0xf]
    %v95 = vld [vmem:[%s3 + $0x8] sm:$0xf]
    %v96 = vld [vmem:[%s3 + $0xc] sm:$0xf]
    %v97 = vld [vmem:[%s3 + $0x10] sm:$0xf]
    %v98 = vld [vmem:[%s3 + $0x14] sm:$0xf]
    %v99 = vld [vmem:[%s3 + $0x18] sm:$0xf]
    %v100 = vld [vmem:[%s3 + $0x1c] sm:$0xf]
    %v101 = vld [vmem:[%s4] sm:$0x1]
    %v103 = vlaneseq
    %v104 = vshrl.u32 %v103, 7
    %v105 = vsub.s32 0, %v104
    %v106 = vrot.slane %v101, %v105
    %v116 = vunpack.c.l.b16 %v93
    %v117 = vunpack.c.l.b16 %v94
    %v118 = vunpack.c.l.b16 %v95
    %v119 = vunpack.c.l.b16 %v96
    %v120 = vunpack.c.l.b16 %v97
    %v121 = vunpack.c.l.b16 %v98
    %v122 = vunpack.c.l.b16 %v99
    %v123 = vunpack.c.l.b16 %v100
    %v124 = vpack.c.b16 %v117, %v116
    %v125 = vpack.c.b16 %v119, %v118
    %v126 = vpack.c.b16 %v121, %v120
    %v127 = vpack.c.b16 %v123, %v122
    %vm132 = vcmask 523264
    %v134 = vsel %vm132, %v92, 0
    %136 = vmatprep.subr.bf16.mxu0 0
    %137 = vmatpush1.bf16.msra.mxu0 %v124
    %138 = vmatprep.subr.bf16.mxu0 0
    %139 = vmatpush1.bf16.msra.mxu0 %v125
    %140 = vmatprep.subr.bf16.mxu0 0
    %141 = vmatpush1.bf16.msra.mxu0 %v126
    %142 = vmatprep.subr.bf16.mxu0 0
    %143 = vmatpush1.bf16.msra.mxu0 %v127
    %144 = vmatprep.subr.bf16.mxu0 0
    %145 = vmatpush1.bf16.msra.mxu0 0
    %146 = vmatprep.subr.bf16.mxu0 0
    %147 = vmatpush1.bf16.msra.mxu0 0
    %148 = vmatprep.subr.bf16.mxu0 0
    %149 = vmatpush1.bf16.msra.mxu0 0
    %150 = vmatprep.subr.bf16.mxu0 0
    %151 = vmatpush1.bf16.msra.mxu0 0
    %152 = vmatprep.subr.bf16.mxu0 0
    %153 = vmatpush1.bf16.msra.mxu0 0
    %154 = vmatprep.subr.bf16.mxu0 0
    %155 = vmatpush1.bf16.msra.mxu0 0
    %156 = vmatprep.subr.bf16.mxu0 0
    %157 = vmatpush1.bf16.msra.mxu0 0
    %158 = vmatprep.subr.bf16.mxu0 0
    %159 = vmatpush1.bf16.msra.mxu0 0
    %160 = vmatprep.subr.bf16.mxu0 0
    %161 = vmatpush1.bf16.msra.mxu0 0
    %162 = vmatprep.subr.bf16.mxu0 0
    %163 = vmatpush1.bf16.msra.mxu0 0
    %164 = vmatprep.subr.bf16.mxu0 0
    %165 = vmatpush1.bf16.msra.mxu0 0
    %166 = vmatprep.subr.bf16.mxu0 0
    %167 = vmatpush1.bf16.msra.mxu0 0
    %168 = vmatprep.mubr.bf16.mxu0 0
    %169 = vmatmul.mubr.bf16.gmra.mrb[0].mxu0 %v134
    %v170 = vpop.f32.mrb[0].mxu0
    %v171 = vadd.f32 %v106, %v170
    %v172 = vpop.f32.mrb[0].mxu0
    %v173 = vpop.f32.mrb[0].mxu0
    %v174 = vpop.f32.mrb[0].mxu0
    %175 = vdwg.mxu0
    %v176 = vmax.f32 %v171, 0.0
    %177 = vst.msk [vmem:[#allocation2] sm:$0xff] %vm47, %v176
    // Predicated region
    $region22: #{tpu_custom_call.1} parent=1 // pred_check
      _
    $region23: #{tpu_custom_call.1} parent=1 // pred_check_branch
      %179 = sbr.rel (0) target = $region25
    $region24: #{tpu_custom_call.1} parent=1 // pred_region
      %s181 = ssub.s32 128, 128
      %182 = vsyncadd [#allocation3], %s181
      %s184 = sshll.u32 [#allocation2], 4
      %s185 = int_to_ptr.vmem [resolvable:$true] %s184
      %187 = dma.vmem_to_hbm [thread:$0]  %s185, 128, %s5, [#allocation3]
    $region25: #{tpu_custom_call.1} parent=1 // pred_fallthru
      _
    // Predicated region
    $region26: #{tpu_custom_call.1} parent=1 // pred_check
      _
    $region27: #{tpu_custom_call.1} parent=1 // pred_check_branch
      %189 = sbr.rel (0) target = $region29
    $region28: #{tpu_custom_call.1} parent=1 // pred_region
      %190 = dma.done [#allocation3], 128
    $region29: #{tpu_custom_call.1} parent=1 // pred_fallthru
      _
    %191 = vsyncpa [#allocation3], 1

</llo_original>
